<compile_context>
chip_gen: v5e
topology: v5e:2x2
jax: 0.10.0
libtpu: 0.0.40
codegen_flags: <defaults>
</compile_context>

<pallas_src>
import jax
import jax.numpy as jnp
from jax.experimental import pallas as pl
from jax.experimental.pallas import tpu as pltpu


# ----------------------------- fused Pallas kernel --------------------------

def _fused_conv_dense_softmax_kernel(pt_ref, w1_ref, b1_ref, wd_ref, bd_ref,
                                     out_ref, a_ref):
    """Per batch tile:  softmax(relu(W1 @ P + b1) . Wd + bd).

    pt_ref : (Kp, B_TILE*HW)   im2col patches, K padded, batch tiled on lanes
    w1_ref : (Cout, Kp)        conv weights, flattened (cin, kh, kw), K padded
    b1_ref : (Cout, 1)         conv bias (broadcast over lanes)
    wd_ref : (Cout*HW, Hp)     dense weights, NCHW row order, lane-padded
    bd_ref : (1, Hp)           dense bias, pad lanes = -1e30
    out_ref: (1, B_TILE, Hp)   softmax output (pad lanes -> 0)
    a_ref  : (B_TILE, Cout*HW) VMEM scratch: conv activation, NCHW flattened
    """
    b_tile = a_ref.shape[0]
    cout = w1_ref.shape[0]
    hw = pt_ref.shape[1] // b_tile

    # Conv2d + bias + ReLU as ONE wide MXU matmul over the whole batch tile:
    # (Cout, Kp) @ (Kp, B_TILE*HW) -> lane-dense (Cout, B_TILE*HW).
    conv = jnp.dot(w1_ref[...], pt_ref[...],
                   preferred_element_type=jnp.float32)
    conv = jnp.maximum(conv + b1_ref[...], 0.0)

    # Scatter into (B_TILE, Cout*HW) NCHW-flatten activation rows.  Static,
    # vreg-aligned (HW = 256 lanes) row copies -- no transposes/reshapes.
    for b in range(b_tile):
        for c in range(cout):
            a_ref[b:b + 1, c * hw:(c + 1) * hw] = \
                conv[c:c + 1, b * hw:(b + 1) * hw]

    # Dense: ONE MXU matmul for the whole batch tile (M = B_TILE, K = Cout*HW).
    acc = jnp.dot(a_ref[...], wd_ref[...],
                  preferred_element_type=jnp.float32) + bd_ref[...]

    # Softmax(axis=-1); pad lanes hold -1e30 -> exp underflows to exactly 0,
    # so they contribute nothing to the sum and come out as 0.
    m = jnp.max(acc, axis=-1, keepdims=True)
    e = jnp.exp(acc - m)
    s = jnp.sum(e, axis=-1, keepdims=True)
    out_ref[0] = (e * pl.reciprocal(s, approx=False)).astype(out_ref.dtype)


# --------------------------- the lwnn-style model ---------------------------

class Lwnn2TorchPallas:
    """Input -> Conv -> ReLU -> Reshape -> Dense -> Softmax, one fused kernel."""

    def __init__(self, batch=2, cin=4, cout=8, kh=3, kw=3, h=16, w=16,
                 hidden=32, b_tile=None):
        self.pads = (1, 1)
        self.strides = (1, 1)
        self.dilations = (1, 1)
        self.shape = (batch, cin, h, w)
        self.cin, self.cout, self.kh, self.kw = cin, cout, kh, kw
        self.hidden = hidden
        key = jax.random.PRNGKey(42)
        k1, k2, k3, k4 = jax.random.split(key, 4)
        # Conv layer: weights (Cout, Cin, KH, KW), bias (Cout,)   [to_LayerConv]
        self.conv_w = jax.random.normal(k1, (cout, cin, kh, kw), jnp.float32) * 0.1
        self.conv_b = jax.random.normal(k2, (cout,), jnp.float32) * 0.1
        # Conv output spatial size (stride 1 / pad 1 keeps h, w here).
        self.ho = (h + 2 * self.pads[0] - self.dilations[0] * (kh - 1) - 1) // self.strides[0] + 1
        self.wo = (w + 2 * self.pads[1] - self.dilations[1] * (kw - 1) - 1) // self.strides[1] + 1
        self.hw = self.ho * self.wo
        # Dense layer: lwnn weights W (in, out), bias (out,)      [to_LayerDense]
        in_features = cout * self.ho * self.wo
        self.dense_w = jax.random.normal(k3, (in_features, hidden), jnp.float32) * 0.02
        self.dense_b = jax.random.normal(k4, (hidden,), jnp.float32) * 0.1
        self.reshape_to = (-1, in_features)                 # [forward_LayerReshape]

        # Batch tile: default keeps >= 2 grid steps (both v7x TensorCores);
        # pass b_tile=batch on single-TC chips for one biggest tile.
        if b_tile is None:
            b_tile = batch // 2 if (batch >= 2 and batch % 2 == 0) else batch
        self.b_tile = max(1, int(b_tile))
        assert batch % self.b_tile == 0

        # ---- kernel-ready parameters (built once; zero runtime cost) ----
        self.k1 = cin * kh * kw
        self.kp = ((self.k1 + 7) // 8) * 8                  # sublane-aligned K
        self.hpad = ((hidden + 127) // 128) * 128           # lane-dense hidden
        w1p = jnp.zeros((cout, self.kp), jnp.float32)
        self._w1 = w1p.at[:, :self.k1].set(self.conv_w.reshape(cout, self.k1))
        self._b1 = self.conv_b.reshape(cout, 1)             # (Cout, 1)
        wd = jnp.zeros((in_features, self.hpad), jnp.float32)
        self._wd = wd.at[:, :hidden].set(self.dense_w)      # (Cout*HW, Hp)
        bd = jnp.full((1, self.hpad), -1e30, jnp.float32)   # kill pad lanes
        self._bd = bd.at[0, :hidden].set(self.dense_b)

    def forward(self, x_nchw):
        n = x_nchw.shape[0]
        b_tile = self.b_tile
        assert n % b_tile == 0
        num_tiles = n // b_tile
        kp, hw, hpad = self.kp, self.hw, self.hpad

        # im2col as one XLA op; output (N, Cin*KH*KW, Ho, Wo) with feature
        # ordering (cin, kh, kw) == torch Conv2d weight flattening.  Pad K to
        # Kp, then lay out as (Kp, N*HW) so the conv matmul is a single
        # (Cout, Kp) @ (Kp, B_TILE*HW) per grid step.
        patches = jax.lax.conv_general_dilated_patches(
            x_nchw, filter_shape=(self.kh, self.kw),
            window_strides=self.strides,
            padding=[(self.pads[0], self.pads[0]),
                     (self.pads[1], self.pads[1])],
            rhs_dilation=self.dilations,
            dimension_numbers=("NCHW", "OIHW", "NCHW"))
        patches = patches.reshape(n, self.k1, hw)            # (N, K, HW)
        patches = jnp.pad(patches, ((0, 0), (0, kp - self.k1), (0, 0)))
        patches_t = patches.transpose(1, 0, 2).reshape(kp, n * hw)  # (Kp, N*HW)

        out = pl.pallas_call(
            _fused_conv_dense_softmax_kernel,
            out_shape=jax.ShapeDtypeStruct((num_tiles, b_tile, hpad),
                                           jnp.float32),
            grid=(num_tiles,),
            in_specs=[
                pl.BlockSpec((kp, b_tile * hw), lambda i: (0, i)),
                pl.BlockSpec((self.cout, kp), lambda i: (0, 0)),
                pl.BlockSpec((self.cout, 1), lambda i: (0, 0)),
                pl.BlockSpec((self.cout * hw, hpad), lambda i: (0, 0)),
                pl.BlockSpec((1, hpad), lambda i: (0, 0)),
            ],
            out_specs=pl.BlockSpec((1, b_tile, hpad), lambda i: (i, 0, 0)),
            scratch_shapes=[pltpu.VMEM((b_tile, self.cout * hw), jnp.float32)],
            compiler_params=pltpu.CompilerParams(
                dimension_semantics=("parallel",)),
        )(patches_t, self._w1, self._b1, self._wd, self._bd)

        # Drop the lane padding:  (num_tiles, B_TILE, Hp) -> (N, hidden)
        return out.reshape(n, hpad)[:, :self.hidden]

    # pure-JAX reference for correctness checking
    def reference(self, x_nchw):
        y = jax.lax.conv_general_dilated(
            x_nchw, self.conv_w, window_strides=self.strides,
            padding=[(self.pads[0], self.pads[0]), (self.pads[1], self.pads[1])],
            rhs_dilation=self.dilations,
            dimension_numbers=("NCHW", "OIHW", "NCHW"))
        y = y + self.conv_b[None, :, None, None]
        y = jnp.maximum(y, 0.0)
        y = y.reshape(self.reshape_to)
        y = y @ self.dense_w + self.dense_b
        return jax.nn.softmax(y, axis=-1)


if __name__ == "__main__":
    model = Lwnn2TorchPallas(batch=2, cin=4, cout=8, kh=3, kw=3, h=16, w=16,
                             hidden=32)
    x = jax.random.normal(jax.random.PRNGKey(0), (2, 4, 16, 16), jnp.float32)

    out = jax.jit(model.forward)(x)
    out = jax.block_until_ready(out)

    ref = model.reference(x)
    assert out.shape == (2, 32), out.shape
    assert jnp.allclose(out, ref, atol=1e-5, rtol=1e-5), "mismatch vs reference"

    print("KERNEL_OK")
</pallas_src>

<mosaic_0001>
module attributes {stable_mosaic.version = 11 : i64} {
  func.func @_fused_conv_dense_softmax_kernel(%arg0: i32, %arg1: memref<40x256xf32, #tpu.memory_space<vmem>>, %arg2: memref<8x40xf32, #tpu.memory_space<vmem>>, %arg3: memref<8x1xf32, #tpu.memory_space<vmem>>, %arg4: memref<2048x128xf32, #tpu.memory_space<vmem>>, %arg5: memref<1x128xf32, #tpu.memory_space<vmem>>, %arg6: memref<1x1x128xf32, #tpu.memory_space<vmem>>, %arg7: memref<1x2048xf32, #tpu.memory_space<vmem>>) attributes {dimension_semantics = [#tpu.dimension_semantics<parallel>], iteration_bounds = array<i64: 2>, scalar_prefetch = 0 : i64, scratch_operands = 1 : i64, tpu.core_type = #tpu.core_type<tc>, window_params = [{transform_indices = @transform_0, window_bounds = array<i64: 40, 256>}, {pipeline_mode = #tpu.pipeline_mode<synchronous>, transform_indices = @transform_1, window_bounds = array<i64: 8, 40>}, {pipeline_mode = #tpu.pipeline_mode<synchronous>, transform_indices = @transform_2, window_bounds = array<i64: 8, 1>}, {pipeline_mode = #tpu.pipeline_mode<synchronous>, transform_indices = @transform_3, window_bounds = array<i64: 2048, 128>}, {pipeline_mode = #tpu.pipeline_mode<synchronous>, transform_indices = @transform_4, window_bounds = array<i64: 1, 128>}, {transform_indices = @transform_5, window_bounds = array<i64: 1, 1, 128>}]} {
    %c0 = arith.constant 0 : index
    %c0_0 = arith.constant 0 : index
    %0 = vector.load %arg2[%c0, %c0_0] : memref<8x40xf32, #tpu.memory_space<vmem>>, vector<8x40xf32>
    %c0_1 = arith.constant 0 : index
    %c0_2 = arith.constant 0 : index
    %1 = vector.load %arg1[%c0_1, %c0_2] : memref<40x256xf32, #tpu.memory_space<vmem>>, vector<40x256xf32>
    %cst = arith.constant dense<0.000000e+00> : vector<8x256xf32>
    %2 = tpu.matmul %0, %1, %cst {dimension_numbers = #tpu.dot_dimension_numbers<[1], [0], [0], [1], [0, 0, 1, 1], [], []>} : vector<8x40xf32>, vector<40x256xf32>, vector<8x256xf32> -> vector<8x256xf32>
    %c0_3 = arith.constant 0 : index
    %c0_4 = arith.constant 0 : index
    %3 = vector.load %arg3[%c0_3, %c0_4] : memref<8x1xf32, #tpu.memory_space<vmem>>, vector<8x1xf32>
    %4 = vector.broadcast %3 : vector<8x1xf32> to vector<8x256xf32>
    %5 = arith.addf %2, %4 : vector<8x256xf32>
    %cst_5 = arith.constant 0.000000e+00 : f32
    %6 = vector.broadcast %cst_5 : f32 to vector<8x256xf32>
    %7 = arith.maximumf %5, %6 : vector<8x256xf32>
    %8 = vector.extract_strided_slice %7 {offsets = [0, 0], sizes = [1, 256], strides = [1, 1]} : vector<8x256xf32> to vector<1x256xf32>
    %c0_6 = arith.constant 0 : index
    %c0_7 = arith.constant 0 : index
    %9 = vector.load %arg7[%c0_6, %c0_7] : memref<1x2048xf32, #tpu.memory_space<vmem>>, vector<1x256xf32>
    tpu.vector_store %arg7[%c0_6, %c0_7], %8 {strides = array<i32>} : memref<1x2048xf32, #tpu.memory_space<vmem>>, vector<1x256xf32>,
    %10 = vector.extract_strided_slice %7 {offsets = [1, 0], sizes = [1, 256], strides = [1, 1]} : vector<8x256xf32> to vector<1x256xf32>
    %c0_8 = arith.constant 0 : index
    %c256 = arith.constant 256 : index
    %11 = vector.load %arg7[%c0_8, %c256] : memref<1x2048xf32, #tpu.memory_space<vmem>>, vector<1x256xf32>
    tpu.vector_store %arg7[%c0_8, %c256], %10 {strides = array<i32>} : memref<1x2048xf32, #tpu.memory_space<vmem>>, vector<1x256xf32>,
    %12 = vector.extract_strided_slice %7 {offsets = [2, 0], sizes = [1, 256], strides = [1, 1]} : vector<8x256xf32> to vector<1x256xf32>
    %c0_9 = arith.constant 0 : index
    %c512 = arith.constant 512 : index
    %13 = vector.load %arg7[%c0_9, %c512] : memref<1x2048xf32, #tpu.memory_space<vmem>>, vector<1x256xf32>
    tpu.vector_store %arg7[%c0_9, %c512], %12 {strides = array<i32>} : memref<1x2048xf32, #tpu.memory_space<vmem>>, vector<1x256xf32>,
    %14 = vector.extract_strided_slice %7 {offsets = [3, 0], sizes = [1, 256], strides = [1, 1]} : vector<8x256xf32> to vector<1x256xf32>
    %c0_10 = arith.constant 0 : index
    %c768 = arith.constant 768 : index
    %15 = vector.load %arg7[%c0_10, %c768] : memref<1x2048xf32, #tpu.memory_space<vmem>>, vector<1x256xf32>
    tpu.vector_store %arg7[%c0_10, %c768], %14 {strides = array<i32>} : memref<1x2048xf32, #tpu.memory_space<vmem>>, vector<1x256xf32>,
    %16 = vector.extract_strided_slice %7 {offsets = [4, 0], sizes = [1, 256], strides = [1, 1]} : vector<8x256xf32> to vector<1x256xf32>
    %c0_11 = arith.constant 0 : index
    %c1024 = arith.constant 1024 : index
    %17 = vector.load %arg7[%c0_11, %c1024] : memref<1x2048xf32, #tpu.memory_space<vmem>>, vector<1x256xf32>
    tpu.vector_store %arg7[%c0_11, %c1024], %16 {strides = array<i32>} : memref<1x2048xf32, #tpu.memory_space<vmem>>, vector<1x256xf32>,
    %18 = vector.extract_strided_slice %7 {offsets = [5, 0], sizes = [1, 256], strides = [1, 1]} : vector<8x256xf32> to vector<1x256xf32>
    %c0_12 = arith.constant 0 : index
    %c1280 = arith.constant 1280 : index
    %19 = vector.load %arg7[%c0_12, %c1280] : memref<1x2048xf32, #tpu.memory_space<vmem>>, vector<1x256xf32>
    tpu.vector_store %arg7[%c0_12, %c1280], %18 {strides = array<i32>} : memref<1x2048xf32, #tpu.memory_space<vmem>>, vector<1x256xf32>,
    %20 = vector.extract_strided_slice %7 {offsets = [6, 0], sizes = [1, 256], strides = [1, 1]} : vector<8x256xf32> to vector<1x256xf32>
    %c0_13 = arith.constant 0 : index
    %c1536 = arith.constant 1536 : index
    %21 = vector.load %arg7[%c0_13, %c1536] : memref<1x2048xf32, #tpu.memory_space<vmem>>, vector<1x256xf32>
    tpu.vector_store %arg7[%c0_13, %c1536], %20 {strides = array<i32>} : memref<1x2048xf32, #tpu.memory_space<vmem>>, vector<1x256xf32>,
    %22 = vector.extract_strided_slice %7 {offsets = [7, 0], sizes = [1, 256], strides = [1, 1]} : vector<8x256xf32> to vector<1x256xf32>
    %c0_14 = arith.constant 0 : index
    %c1792 = arith.constant 1792 : index
    %23 = vector.load %arg7[%c0_14, %c1792] : memref<1x2048xf32, #tpu.memory_space<vmem>>, vector<1x256xf32>
    tpu.vector_store %arg7[%c0_14, %c1792], %22 {strides = array<i32>} : memref<1x2048xf32, #tpu.memory_space<vmem>>, vector<1x256xf32>,
    %c0_15 = arith.constant 0 : index
    %c0_16 = arith.constant 0 : index
    %24 = vector.load %arg7[%c0_15, %c0_16] : memref<1x2048xf32, #tpu.memory_space<vmem>>, vector<1x2048xf32>
    %c0_17 = arith.constant 0 : index
    %c0_18 = arith.constant 0 : index
    %25 = vector.load %arg4[%c0_17, %c0_18] : memref<2048x128xf32, #tpu.memory_space<vmem>>, vector<2048x128xf32>
    %cst_19 = arith.constant dense<0.000000e+00> : vector<1x128xf32>
    %26 = tpu.matmul %24, %25, %cst_19 {dimension_numbers = #tpu.dot_dimension_numbers<[1], [0], [0], [1], [0, 0, 1, 1], [], []>} : vector<1x2048xf32>, vector<2048x128xf32>, vector<1x128xf32> -> vector<1x128xf32>
    %c0_20 = arith.constant 0 : index
    %c0_21 = arith.constant 0 : index
    %27 = vector.load %arg5[%c0_20, %c0_21] : memref<1x128xf32, #tpu.memory_space<vmem>>, vector<1x128xf32>
    %28 = arith.addf %26, %27 : vector<1x128xf32>
    %cst_22 = arith.constant dense<0xFF800000> : vector<1xf32>
    %29 = vector.multi_reduction <maximumf>, %28, %cst_22 [1] : vector<1x128xf32> to vector<1xf32>
    %30 = vector.shape_cast %29 : vector<1xf32> to vector<1x1xf32>
    %31 = vector.broadcast %30 : vector<1x1xf32> to vector<1x128xf32>
    %32 = arith.subf %28, %31 : vector<1x128xf32>
    %33 = math.exp %32 : vector<1x128xf32>
    %cst_23 = arith.constant dense<0.000000e+00> : vector<1xf32>
    %34 = vector.multi_reduction <add>, %33, %cst_23 [1] : vector<1x128xf32> to vector<1xf32>
    %35 = vector.shape_cast %34 : vector<1xf32> to vector<1x1xf32>
    %36 = tpu.reciprocal %35 : vector<1x1xf32> -> vector<1x1xf32>
    %37 = vector.broadcast %36 : vector<1x1xf32> to vector<1x128xf32>
    %38 = arith.mulf %33, %37 : vector<1x128xf32>
    %c0_24 = arith.constant 0 : index
    %c0_25 = arith.constant 0 : index
    %c0_26 = arith.constant 0 : index
    %39 = vector.load %arg6[%c0_24, %c0_25, %c0_26] : memref<1x1x128xf32, #tpu.memory_space<vmem>>, vector<1x1x128xf32>
    %40 = vector.shape_cast %39 : vector<1x1x128xf32> to vector<1x128xf32>
    %41 = vector.shape_cast %38 : vector<1x128xf32> to vector<1x1x128xf32>
    tpu.vector_store %arg6[%c0_24, %c0_25, %c0_26], %41 {strides = array<i32>} : memref<1x1x128xf32, #tpu.memory_space<vmem>>, vector<1x1x128xf32>,
    return
  }
  func.func @transform_0(%arg0: i32) -> (i32, i32) {
    %c0_i32 = arith.constant 0 : i32
    %c0_i32_0 = arith.constant 0 : i32
    return %c0_i32, %arg0 : i32, i32
  }
  func.func @transform_1(%arg0: i32) -> (i32, i32) {
    %c0_i32 = arith.constant 0 : i32
    %c0_i32_0 = arith.constant 0 : i32
    %c0_i32_1 = arith.constant 0 : i32
    return %c0_i32, %c0_i32_0 : i32, i32
  }
  func.func @transform_2(%arg0: i32) -> (i32, i32) {
    %c0_i32 = arith.constant 0 : i32
    %c0_i32_0 = arith.constant 0 : i32
    %c0_i32_1 = arith.constant 0 : i32
    return %c0_i32, %c0_i32_0 : i32, i32
  }
  func.func @transform_3(%arg0: i32) -> (i32, i32) {
    %c0_i32 = arith.constant 0 : i32
    %c0_i32_0 = arith.constant 0 : i32
    %c0_i32_1 = arith.constant 0 : i32
    return %c0_i32, %c0_i32_0 : i32, i32
  }
  func.func @transform_4(%arg0: i32) -> (i32, i32) {
    %c0_i32 = arith.constant 0 : i32
    %c0_i32_0 = arith.constant 0 : i32
    %c0_i32_1 = arith.constant 0 : i32
    return %c0_i32, %c0_i32_0 : i32, i32
  }
  func.func @transform_5(%arg0: i32) -> (i32, i32, i32) {
    %c0_i32 = arith.constant 0 : i32
    %c0_i32_0 = arith.constant 0 : i32
    %c0_i32_1 = arith.constant 0 : i32
    return %arg0, %c0_i32, %c0_i32_0 : i32, i32, i32
  }
}

</mosaic_0001>

<llo_original>
// kernel: forward.1
$region0: #{forward.1}
  #allocation0 [shape = 'u32[]', space=smem, size = 0x4, offset = 0x4, fixed_abs, tag = 'smem constant byte address 0x4 - core index']
  #allocation1 [shape = 'u32[72,128]{1,0:T(1,128)}', space=vmem, size = 0x9000, scoped, tag = 'internal scratch']
  #allocation2 [shape = 'f32[1,2048]{1,0:T(1,128)}', space=vmem, size = 0x2000, scoped, tag = 'scratch operand']
  %s0 = inlined_call_operand.vmem [shape: f32[40,512], index: 0, kind: input, shape index: {}]
  %s1 = inlined_call_operand.vmem [shape: f32[8,40], index: 1, kind: input, shape index: {}]
  %s2 = inlined_call_operand.vmem [shape: f32[8,1], index: 2, kind: input, shape index: {}]
  %s3 = inlined_call_operand.vmem [shape: f32[2048,128], index: 3, kind: input, shape index: {}]
  %s4 = inlined_call_operand.vmem [shape: f32[1,128], index: 4, kind: input, shape index: {}]
  %s5 = inlined_call_operand.hbm [shape: f32[2,1,128], index: 5, kind: output, shape index: {}]
  %s6 = sld [smem:[#allocation0]]
  $region76: #{forward.1} parent=0
    _
  %s8 = ssub.s32 1, %s6
  %s9 = scalar_select 0, %s8, %s6
  $region1: #{forward.1} parent=0
    #allocation3 [shape = 'u8[81920]{0}', space=vmem, size = 0x14000, scoped, tag = 'input window, operand 0']
    #allocation4 [shape = 'u8[1024]{0}', space=vmem, size = 0x400, scoped, tag = 'output window, operand 0']
    #allocation5 [shape = 's32[2]{0}', space=sflag, size = 0x8, scoped, tag = 'scoped memory for forward.1']
    %10 = vsyncpa [#allocation5], 0
    %s11 = scalar_lea.sflag [#allocation5], 1
    %12 = vsyncpa %s11, 0
    loop: start=0, step=1, limit=4
    $region2: #{forward.1} parent=1 // loop_pre_header
      _
    $region3: #{forward.1} parent=1 // loop_header
      %s14 = sphi 0, %s18
      %p15 = scmp.ge.s32.totalorder %s14, 4
      %s24 = sphi 0, %s26
      %s27 = sphi 0, %s24
      %s28 = sphi 0, %s27
      %s44 = sphi 0, %s28
      %s48 = sphi 0, %s48
      %s50 = sphi 0, %s48
      %s51 = sphi 0, %s50
      %s65 = sphi 0, %s51
      %s69 = sphi 0, %s69
      %s71 = sphi 0, %s69
      %s72 = sphi 0, %s71
      %s86 = sphi 0, %s72
      %s90 = sphi 0, %s90
      %s92 = sphi 0, %s90
      %s93 = sphi 0, %s92
      %s107 = sphi 0, %s93
      %s111 = sphi 0, %s111
      %s113 = sphi 0, %s111
      %s114 = sphi 0, %s113
      %s128 = sphi 0, %s114
      %s134 = sphi 0, %s136
      %s137 = sphi 0, %s134
      %s138 = sphi 0, %s137
      %s154 = sphi 0, %s138
    $region4: #{forward.1} parent=1 // loop_header_branch
      %17 = sbr.rel (%p15) target = $region8
    $region5: #{forward.1} parent=1 // loop_body
      %s19 = ssub.s32 %s14, 1
      %s20 = ssub.s32 %s14, 2
      %s21 = sadd.s32 %s14, 1
      %s22 = ssub.s32 %s14, %s21
      %p23 = scmp.eq.s32.totalorder %s22, 0
      %s25 = sadd.s32 %s24, 1
      %s26 = scalar_select %p23, %s24, %s25
      %p29 = pneg %p23
      %p30 = scmp.eq.s32.totalorder %s14, 1
      %p31 = por %p29, %p30
      %p32 = scmp.ne.s32.totalorder %s24, %s27
      %p33 = scmp.eq.s32.totalorder %s14, 0
      %p34 = por %p32, %p33
      %p35 = scmp.ne.s32.totalorder %s24, %s27
      %p36 = scmp.eq.s32.totalorder %s19, 1
      %p37 = por %p35, %p36
      %p38 = scmp.ne.s32.totalorder %s27, %s28
      %p39 = scmp.eq.s32.totalorder %s19, 0
      %p40 = por %p38, %p39
      %p41 = scmp.ne.s32.totalorder %s27, %s28
      %p42 = scmp.eq.s32.totalorder %s20, 1
      %p43 = por %p41, %p42
      %p45 = scmp.ne.s32.totalorder %s28, %s44
      %p46 = scmp.eq.s32.totalorder %s20, 0
      %p47 = por %p45, %p46
      %s49 = sadd.s32 %s48, 1
      %p52 = scmp.eq.s32.totalorder %s14, 1
      %p53 = scmp.ne.s32.totalorder %s48, %s50
      %p54 = scmp.eq.s32.totalorder %s14, 0
      %p55 = por %p53, %p54
      %p56 = scmp.ne.s32.totalorder %s48, %s50
      %p57 = scmp.eq.s32.totalorder %s19, 1
      %p58 = por %p56, %p57
      %p59 = scmp.ne.s32.totalorder %s50, %s51
      %p60 = scmp.eq.s32.totalorder %s19, 0
      %p61 = por %p59, %p60
      %p62 = scmp.ne.s32.totalorder %s50, %s51
      %p63 = scmp.eq.s32.totalorder %s20, 1
      %p64 = por %p62, %p63
      %p66 = scmp.ne.s32.totalorder %s51, %s65
      %p67 = scmp.eq.s32.totalorder %s20, 0
      %p68 = por %p66, %p67
      %s70 = sadd.s32 %s69, 1
      %p73 = scmp.eq.s32.totalorder %s14, 1
      %p74 = scmp.ne.s32.totalorder %s69, %s71
      %p75 = scmp.eq.s32.totalorder %s14, 0
      %p76 = por %p74, %p75
      %p77 = scmp.ne.s32.totalorder %s69, %s71
      %p78 = scmp.eq.s32.totalorder %s19, 1
      %p79 = por %p77, %p78
      %p80 = scmp.ne.s32.totalorder %s71, %s72
      %p81 = scmp.eq.s32.totalorder %s19, 0
      %p82 = por %p80, %p81
      %p83 = scmp.ne.s32.totalorder %s71, %s72
      %p84 = scmp.eq.s32.totalorder %s20, 1
      %p85 = por %p83, %p84
      %p87 = scmp.ne.s32.totalorder %s72, %s86
      %p88 = scmp.eq.s32.totalorder %s20, 0
      %p89 = por %p87, %p88
      %s91 = sadd.s32 %s90, 1
      %p94 = scmp.eq.s32.totalorder %s14, 1
      %p95 = scmp.ne.s32.totalorder %s90, %s92
      %p96 = scmp.eq.s32.totalorder %s14, 0
      %p97 = por %p95, %p96
      %p98 = scmp.ne.s32.totalorder %s90, %s92
      %p99 = scmp.eq.s32.totalorder %s19, 1
      %p100 = por %p98, %p99
      %p101 = scmp.ne.s32.totalorder %s92, %s93
      %p102 = scmp.eq.s32.totalorder %s19, 0
      %p103 = por %p101, %p102
      %p104 = scmp.ne.s32.totalorder %s92, %s93
      %p105 = scmp.eq.s32.totalorder %s20, 1
      %p106 = por %p104, %p105
      %p108 = scmp.ne.s32.totalorder %s93, %s107
      %p109 = scmp.eq.s32.totalorder %s20, 0
      %p110 = por %p108, %p109
      %s112 = sadd.s32 %s111, 1
      %p115 = scmp.eq.s32.totalorder %s14, 1
      %p116 = scmp.ne.s32.totalorder %s111, %s113
      %p117 = scmp.eq.s32.totalorder %s14, 0
      %p118 = por %p116, %p117
      %p119 = scmp.ne.s32.totalorder %s111, %s113
      %p120 = scmp.eq.s32.totalorder %s19, 1
      %p121 = por %p119, %p120
      %p122 = scmp.ne.s32.totalorder %s113, %s114
      %p123 = scmp.eq.s32.totalorder %s19, 0
      %p124 = por %p122, %p123
      %p125 = scmp.ne.s32.totalorder %s113, %s114
      %p126 = scmp.eq.s32.totalorder %s20, 1
      %p127 = por %p125, %p126
      %p129 = scmp.ne.s32.totalorder %s114, %s128
      %p130 = scmp.eq.s32.totalorder %s20, 0
      %p131 = por %p129, %p130
      %s132 = ssub.s32 %s14, %s21
      %p133 = scmp.eq.s32.totalorder %s132, 0
      %s135 = sadd.s32 %s134, 1
      %s136 = scalar_select %p133, %s134, %s135
      %p139 = pneg %p133
      %p140 = scmp.eq.s32.totalorder %s14, 1
      %p141 = por %p139, %p140
      %p142 = scmp.ne.s32.totalorder %s134, %s137
      %p143 = scmp.eq.s32.totalorder %s14, 0
      %p144 = por %p142, %p143
      %p145 = scmp.ne.s32.totalorder %s134, %s137
      %p146 = scmp.eq.s32.totalorder %s19, 1
      %p147 = por %p145, %p146
      %p148 = scmp.ne.s32.totalorder %s137, %s138
      %p149 = scmp.eq.s32.totalorder %s19, 0
      %p150 = por %p148, %p149
      %p151 = scmp.ne.s32.totalorder %s137, %s138
      %p152 = scmp.eq.s32.totalorder %s20, 1
      %p153 = por %p151, %p152
      %p155 = scmp.ne.s32.totalorder %s138, %s154
      %p156 = scmp.eq.s32.totalorder %s20, 0
      %p157 = por %p155, %p156
      %p158 = scmp.le.s32.totalorder 1, %s14
      %p159 = scmp.lt.s32.totalorder %s14, 3
      %p160 = pnand %p158, %p159
      %p161 = pneg %p160
      // Predicated region
      $region9: #{forward.1} parent=5 // pred_check
        _
      $region10: #{forward.1} parent=5 // pred_check_branch
        %163 = sbr.rel (%p160) target = $region12
      $region11: #{forward.1} parent=5 // pred_region
        %s164 = ssub.s32 %s14, 1
        // Predicated region
        $region13: #{forward.1} parent=11 // pred_check
          %p165 = pneg %p61
        $region14: #{forward.1} parent=11 // pred_check_branch
          %167 = sbr.rel (%p165) target = $region16
        $region15: #{forward.1} parent=11 // pred_region
          _
        $region16: #{forward.1} parent=11 // pred_fallthru
          _
        // Predicated region
        $region17: #{forward.1} parent=11 // pred_check
          %p168 = pneg %p82
        $region18: #{forward.1} parent=11 // pred_check_branch
          %170 = sbr.rel (%p168) target = $region20
        $region19: #{forward.1} parent=11 // pred_region
          _
        $region20: #{forward.1} parent=11 // pred_fallthru
          _
        // Predicated region
        $region21: #{forward.1} parent=11 // pred_check
          %p171 = pneg %p103
        $region22: #{forward.1} parent=11 // pred_check_branch
          %173 = sbr.rel (%p171) target = $region24
        $region23: #{forward.1} parent=11 // pred_region
          _
        $region24: #{forward.1} parent=11 // pred_fallthru
          _
        // Predicated region
        $region25: #{forward.1} parent=11 // pred_check
          %p174 = pneg %p124
        $region26: #{forward.1} parent=11 // pred_check_branch
          %176 = sbr.rel (%p174) target = $region28
        $region27: #{forward.1} parent=11 // pred_region
          _
        $region28: #{forward.1} parent=11 // pred_fallthru
          _
      $region12: #{forward.1} parent=5 // pred_fallthru
        _
      %p177 = scmp.lt.s32.totalorder %s14, 2
      // Predicated region
      $region29: #{forward.1} parent=5 // pred_check
        %p178 = pneg %p177
      $region30: #{forward.1} parent=5 // pred_check_branch
        %180 = sbr.rel (%p178) target = $region32
      $region31: #{forward.1} parent=5 // pred_region
        // Predicated region
        $region33: #{forward.1} parent=31 // pred_check
          %p181 = pneg %p34
        $region34: #{forward.1} parent=31 // pred_check_branch
          %183 = sbr.rel (%p181) target = $region36
        $region35: #{forward.1} parent=31 // pred_region
          %s184 = sand.u32 %s24, 1
          %s185 = sand.u32 %s24, 1
          %s186 = smul.addr %s185, 80
          %s187 = scalar_lea.vmem [#allocation3], %s186
          %s188 = smul.u32 2, %s14
          %s189 = smul.addr %s188, 8
          %s190 = scalar_lea.vmem %s0, %s189
          // Predicated region
          $region37: #{forward.1} parent=35 // pred_check
            _
          $region38: #{forward.1} parent=35 // pred_check_branch
            %192 = sbr.rel (0) target = $region40
          $region39: #{forward.1} parent=35 // pred_region
            // Predicated region
            $region41: #{forward.1} parent=39 // pred_check
              _
            $region42: #{forward.1} parent=39 // pred_check_branch
              %194 = sbr.rel (0) target = $region44
            $region43: #{forward.1} parent=39 // pred_region
              loop: start=0, step=1, limit=1
              $region45: #{forward.1} parent=43 // loop_pre_header
                _
              $region46: #{forward.1} parent=43 // loop_header
                %s196 = sphi 0, %s200
                %p197 = scmp.ge.s32.totalorder %s196, 1
                %s201 = sphi %s190, %s190
                %s202 = sphi %s187, %s187
              $region47: #{forward.1} parent=43 // loop_header_branch
                %199 = sbr.rel (%p197) target = $region51
              $region48: #{forward.1} parent=43 // loop_body
                %v203 = vld [vmem:[%s201] sm:$0xff]
                %204 = vst [vmem:[%s202] sm:$0xff] %v203
                %v205 = vld [vmem:[%s201 + $0x8] sm:$0xff]
                %206 = vst [vmem:[%s202 + $0x8] sm:$0xff] %v205
                %v207 = vld [vmem:[%s201 + $0x20] sm:$0xff]
                %208 = vst [vmem:[%s202 + $0x10] sm:$0xff] %v207
                %v209 = vld [vmem:[%s201 + $0x28] sm:$0xff]
                %210 = vst [vmem:[%s202 + $0x18] sm:$0xff] %v209
                %v211 = vld [vmem:[%s201 + $0x40] sm:$0xff]
                %212 = vst [vmem:[%s202 + $0x20] sm:$0xff] %v211
                %v213 = vld [vmem:[%s201 + $0x48] sm:$0xff]
                %214 = vst [vmem:[%s202 + $0x28] sm:$0xff] %v213
                %v215 = vld [vmem:[%s201 + $0x60] sm:$0xff]
                %216 = vst [vmem:[%s202 + $0x30] sm:$0xff] %v215
                %v217 = vld [vmem:[%s201 + $0x68] sm:$0xff]
                %218 = vst [vmem:[%s202 + $0x38] sm:$0xff] %v217
                %v219 = vld [vmem:[%s201 + $0x80] sm:$0xff]
                %220 = vst [vmem:[%s202 + $0x40] sm:$0xff] %v219
                %v221 = vld [vmem:[%s201 + $0x88] sm:$0xff]
                %222 = vst [vmem:[%s202 + $0x48] sm:$0xff] %v221
              $region49: #{forward.1} parent=43 // loop_footer
                %s200 = sadd.s32 1, %s196
              $region50: #{forward.1} parent=43 // loop_footer_branch
                %195 = sbr.rel target = $region46
              $region51: #{forward.1} parent=43 // loop_exit
                _
            $region44: #{forward.1} parent=39 // pred_fallthru
              _
            // Predicated region
            $region52: #{forward.1} parent=39 // pred_check
              _
            $region53: #{forward.1} parent=39 // pred_check_branch
              %224 = sbr.rel target = $region55
            $region54: #{forward.1} parent=39 // pred_region
              _
            $region55: #{forward.1} parent=39 // pred_fallthru
              _
          $region40: #{forward.1} parent=35 // pred_fallthru
            _
          %225 = vnop
        $region36: #{forward.1} parent=31 // pred_fallthru
          _
      $region32: #{forward.1} parent=5 // pred_fallthru
        _
      %p226 = scmp.le.s32.totalorder 1, %s14
      %p227 = scmp.lt.s32.totalorder %s14, 3
      %p228 = pnand %p226, %p227
      %p229 = pneg %p228
      // Predicated region
      $region56: #{forward.1} parent=5 // pred_check
        _
      $region57: #{forward.1} parent=5 // pred_check_branch
        %231 = sbr.rel (%p228) target = $region59
      $region58: #{forward.1} parent=5 // pred_region
        %s232 = ssub.s32 %s14, 1
        %s233 = sand.u32 %s27, 1
        %s234 = sand.u32 %s27, 1
        %s235 = smul.addr %s234, 80
        %s236 = scalar_lea.vmem [#allocation3], %s235
        // Predicated region
        $region60: #{forward.1} parent=58 // pred_check
          %p237 = pneg %p40
        $region61: #{forward.1} parent=58 // pred_check_branch
          %239 = sbr.rel (%p237) target = $region63
        $region62: #{forward.1} parent=58 // pred_region
          _
        $region63: #{forward.1} parent=58 // pred_fallthru
          _
        %s240 = sand.u32 %s27, 1
        %s241 = sand.u32 %s27, 1
        %s242 = smul.addr %s241, 80
        %s243 = scalar_lea.vmem [#allocation3], %s242
        %p244 = pneg %p40
        %p245 = pneg %p37
        %p246 = pneg %p61
        %p247 = pneg %p58
        %p248 = pneg %p82
        %p249 = pneg %p79
        %p250 = pneg %p103
        %p251 = pneg %p100
        %p252 = pneg %p124
        %p253 = pneg %p121
        %p254 = pneg %p150
        %p255 = pneg %p147
        %s256 = sand.u32 %s137, 1
        %s257 = scalar_lea.sflag [#allocation5], %s256
        %s258 = sand.u32 %s137, 1
        %s259 = scalar_lea.vmem [#allocation4], %s258
        %s260 = smul.u32 2, %s19
        %v261 = vld [vmem:[%s1] sm:$0xff]
        %v262 = vld [vmem:[%s236] sm:$0xff]
        %v263 = vld [vmem:[%s236 + $0x8] sm:$0xff]
        %v264 = vld [vmem:[%s236 + $0x10] sm:$0xff]
        %v265 = vld [vmem:[%s236 + $0x18] sm:$0xff]
        %v266 = vld [vmem:[%s236 + $0x20] sm:$0xff]
        %v267 = vld [vmem:[%s236 + $0x28] sm:$0xff]
        %v268 = vld [vmem:[%s236 + $0x30] sm:$0xff]
        %v269 = vld [vmem:[%s236 + $0x38] sm:$0xff]
        %v270 = vld [vmem:[%s236 + $0x40] sm:$0xff]
        %v271 = vld [vmem:[%s236 + $0x48] sm:$0xff]
        %v272 = vld [vmem:[%s2] sm:$0xff]
        %274 = vset.pattern.permute.xlu0 0
        %275 = vperm.xlu0 %274, %v272
        %v276 = vpop.permute.xlu0 %275
        %vm278 = vcmask 326656
        %v280 = vsel %vm278, %v261, 0
        %282 = vmatpush.msra.mxu0 0.0
        %283 = vmatpush.msra.mxu0 0.0
        %284 = vmatpush.msra.mxu0 0.0
        %285 = vmatpush.msra.mxu0 0.0
        %286 = vmatpush.msra.mxu0 0.0
        %287 = vmatpush.msra.mxu0 0.0
        %288 = vmatpush.msra.mxu0 0.0
        %289 = vmatpush.msra.mxu0 0.0
        %290 = vmatpush.msra.mxu0 0.0
        %291 = vmatpush.msra.mxu0 0.0
        %292 = vmatpush.msra.mxu0 0.0
        %293 = vmatpush.msra.mxu0 %v270
        %294 = vmatpush.msra.mxu0 %v268
        %295 = vmatpush.msra.mxu0 %v266
        %296 = vmatpush.msra.mxu0 %v264
        %297 = vmatpush.msra.mxu0 %v262
        %298 = vmatmul.f32.gmra.mxu0 %v280
        %v299 = vpop.f32.mrf.mxu0
        %v300 = vadd.f32 %v276, %v299
        %301 = vdwg.mxu0
        %302 = vmatpush.msra.mxu0 0.0
        %303 = vmatpush.msra.mxu0 0.0
        %304 = vmatpush.msra.mxu0 0.0
        %305 = vmatpush.msra.mxu0 0.0
        %306 = vmatpush.msra.mxu0 0.0
        %307 = vmatpush.msra.mxu0 0.0
        %308 = vmatpush.msra.mxu0 0.0
        %309 = vmatpush.msra.mxu0 0.0
        %310 = vmatpush.msra.mxu0 0.0
        %311 = vmatpush.msra.mxu0 0.0
        %312 = vmatpush.msra.mxu0 0.0
        %313 = vmatpush.msra.mxu0 %v271
        %314 = vmatpush.msra.mxu0 %v269
        %315 = vmatpush.msra.mxu0 %v267
        %316 = vmatpush.msra.mxu0 %v265
        %317 = vmatpush.msra.mxu0 %v263
        %318 = vmatmul.f32.gmra.mxu0 %v280
        %v319 = vpop.f32.mrf.mxu0
        %v320 = vadd.f32 %v276, %v319
        %321 = vdwg.mxu0
        %v322 = vmax.f32 %v300, 0.0
        %v323 = vmax.f32 %v320, 0.0
        %v326 = vrot.slane %v323, 7
        %vm327 = vcmask 1040384
        %v328 = vsel %vm327, %v322, %v326
        %v330 = vlaneseq
        %vm331 = vcmp.ge.s32.totalorder %v330, 0
        %vm332 = vcmp.lt.s32.totalorder %v330, 256
        %vm333 = vmand %vm331, %vm332
        %334 = vst.msk [vmem:[#allocation2] sm:$0x3] %vm333, %v328
        %335 = vst [vmem:[#allocation1] sm:$0xff] %v322
        %336 = vst [vmem:[#allocation1 + $0x9] sm:$0xff] %v323
        %s337 = scalar_lea.vmem [#allocation1], 1
        %v338 = vld [vmem:[%s337] ss:$9 sm:$0xff]
        %340 = vst.msk [vmem:[#allocation2 + $0x2] sm:$0x3] %vm333, %v338
        %341 = vst [vmem:[#allocation1] sm:$0xff] %v322
        %342 = vst [vmem:[#allocation1 + $0x9] sm:$0xff] %v323
        %s343 = scalar_lea.vmem [#allocation1], 2
        %v344 = vld [vmem:[%s343] ss:$9 sm:$0xff]
        %346 = vst.msk [vmem:[#allocation2 + $0x4] sm:$0x3] %vm333, %v344
        %347 = vst [vmem:[#allocation1] sm:$0xff] %v322
        %348 = vst [vmem:[#allocation1 + $0x9] sm:$0xff] %v323
        %s349 = scalar_lea.vmem [#allocation1], 3
        %v350 = vld [vmem:[%s349] ss:$9 sm:$0xff]
        %352 = vst.msk [vmem:[#allocation2 + $0x6] sm:$0x3] %vm333, %v350
        %353 = vst [vmem:[#allocation1] sm:$0xff] %v322
        %354 = vst [vmem:[#allocation1 + $0x9] sm:$0xff] %v323
        %s355 = scalar_lea.vmem [#allocation1], 4
        %v356 = vld [vmem:[%s355] ss:$9 sm:$0xff]
        %358 = vst.msk [vmem:[#allocation2 + $0x8] sm:$0x3] %vm333, %v356
        %359 = vst [vmem:[#allocation1] sm:$0xff] %v322
        %360 = vst [vmem:[#allocation1 + $0x9] sm:$0xff] %v323
        %s361 = scalar_lea.vmem [#allocation1], 5
        %v362 = vld [vmem:[%s361] ss:$9 sm:$0xff]
        %364 = vst.msk [vmem:[#allocation2 + $0xa] sm:$0x3] %vm333, %v362
        %365 = vst [vmem:[#allocation1] sm:$0xff] %v322
        %366 = vst [vmem:[#allocation1 + $0x9] sm:$0xff] %v323
        %s367 = scalar_lea.vmem [#allocation1], 6
        %v368 = vld [vmem:[%s367] ss:$9 sm:$0xff]
        %370 = vst.msk [vmem:[#allocation2 + $0xc] sm:$0x3] %vm333, %v368
        %371 = vst [vmem:[#allocation1] sm:$0xff] %v322
        %372 = vst [vmem:[#allocation1 + $0x9] sm:$0xff] %v323
        %s373 = scalar_lea.vmem [#allocation1], 7
        %v374 = vld [vmem:[%s373] ss:$9 sm:$0xff]
        %376 = vst.msk [vmem:[#allocation2 + $0xe] sm:$0x3] %vm333, %v374
        %v377 = vld [vmem:[#allocation2] sm:$0xff]
        %v378 = vld [vmem:[#allocation2 + $0x8] sm:$0xff]
        %v379 = vld [vmem:[%s3] sm:$0xff]
        %v380 = vld [vmem:[%s3 + $0x8] sm:$0xff]
        %v381 = vld [vmem:[%s3 + $0x10] sm:$0xff]
        %v382 = vld [vmem:[%s3 + $0x18] sm:$0xff]
        %v383 = vld [vmem:[%s3 + $0x20] sm:$0xff]
        %v384 = vld [vmem:[%s3 + $0x28] sm:$0xff]
        %v385 = vld [vmem:[%s3 + $0x30] sm:$0xff]
        %v386 = vld [vmem:[%s3 + $0x38] sm:$0xff]
        %v387 = vld [vmem:[%s3 + $0x40] sm:$0xff]
        %v388 = vld [vmem:[%s3 + $0x48] sm:$0xff]
        %v389 = vld [vmem:[%s3 + $0x50] sm:$0xff]
        %v390 = vld [vmem:[%s3 + $0x58] sm:$0xff]
        %v391 = vld [vmem:[%s3 + $0x60] sm:$0xff]
        %v392 = vld [vmem:[%s3 + $0x68] sm:$0xff]
        %v393 = vld [vmem:[%s3 + $0x70] sm:$0xff]
        %v394 = vld [vmem:[%s3 + $0x78] sm:$0xff]
        %v395 = vld [vmem:[%s3 + $0x80] sm:$0xff]
        %v396 = vld [vmem:[%s3 + $0x88] sm:$0xff]
        %v397 = vld [vmem:[%s3 + $0x90] sm:$0xff]
        %v398 = vld [vmem:[%s3 + $0x98] sm:$0xff]
        %v399 = vld [vmem:[%s3 + $0xa0] sm:$0xff]
        %v400 = vld [vmem:[%s3 + $0xa8] sm:$0xff]
        %v401 = vld [vmem:[%s3 + $0xb0] sm:$0xff]
        %v402 = vld [vmem:[%s3 + $0xb8] sm:$0xff]
        %v403 = vld [vmem:[%s3 + $0xc0] sm:$0xff]
        %v404 = vld [vmem:[%s3 + $0xc8] sm:$0xff]
        %v405 = vld [vmem:[%s3 + $0xd0] sm:$0xff]
        %v406 = vld [vmem:[%s3 + $0xd8] sm:$0xff]
        %v407 = vld [vmem:[%s3 + $0xe0] sm:$0xff]
        %v408 = vld [vmem:[%s3 + $0xe8] sm:$0xff]
        %v409 = vld [vmem:[%s3 + $0xf0] sm:$0xff]
        %v410 = vld [vmem:[%s3 + $0xf8] sm:$0xff]
        %v411 = vld [vmem:[%s3 + $0x100] sm:$0xff]
        %v412 = vld [vmem:[%s3 + $0x108] sm:$0xff]
        %v413 = vld [vmem:[%s3 + $0x110] sm:$0xff]
        %v414 = vld [vmem:[%s3 + $0x118] sm:$0xff]
        %v415 = vld [vmem:[%s3 + $0x120] sm:$0xff]
        %v416 = vld [vmem:[%s3 + $0x128] sm:$0xff]
        %v417 = vld [vmem:[%s3 + $0x130] sm:$0xff]
        %v418 = vld [vmem:[%s3 + $0x138] sm:$0xff]
        %v419 = vld [vmem:[%s3 + $0x140] sm:$0xff]
        %v420 = vld [vmem:[%s3 + $0x148] sm:$0xff]
        %v421 = vld [vmem:[%s3 + $0x150] sm:$0xff]
        %v422 = vld [vmem:[%s3 + $0x158] sm:$0xff]
        %v423 = vld [vmem:[%s3 + $0x160] sm:$0xff]
        %v424 = vld [vmem:[%s3 + $0x168] sm:$0xff]
        %v425 = vld [vmem:[%s3 + $0x170] sm:$0xff]
        %v426 = vld [vmem:[%s3 + $0x178] sm:$0xff]
        %v427 = vld [vmem:[%s3 + $0x180] sm:$0xff]
        %v428 = vld [vmem:[%s3 + $0x188] sm:$0xff]
        %v429 = vld [vmem:[%s3 + $0x190] sm:$0xff]
        %v430 = vld [vmem:[%s3 + $0x198] sm:$0xff]
        %v431 = vld [vmem:[%s3 + $0x1a0] sm:$0xff]
        %v432 = vld [vmem:[%s3 + $0x1a8] sm:$0xff]
        %v433 = vld [vmem:[%s3 + $0x1b0] sm:$0xff]
        %v434 = vld [vmem:[%s3 + $0x1b8] sm:$0xff]
        %v435 = vld [vmem:[%s3 + $0x1c0] sm:$0xff]
        %v436 = vld [vmem:[%s3 + $0x1c8] sm:$0xff]
        %v437 = vld [vmem:[%s3 + $0x1d0] sm:$0xff]
        %v438 = vld [vmem:[%s3 + $0x1d8] sm:$0xff]
        %v439 = vld [vmem:[%s3 + $0x1e0] sm:$0xff]
        %v440 = vld [vmem:[%s3 + $0x1e8] sm:$0xff]
        %v441 = vld [vmem:[%s3 + $0x1f0] sm:$0xff]
        %v442 = vld [vmem:[%s3 + $0x1f8] sm:$0xff]
        %v443 = vld [vmem:[%s3 + $0x200] sm:$0xff]
        %v444 = vld [vmem:[%s3 + $0x208] sm:$0xff]
        %v445 = vld [vmem:[%s3 + $0x210] sm:$0xff]
        %v446 = vld [vmem:[%s3 + $0x218] sm:$0xff]
        %v447 = vld [vmem:[%s3 + $0x220] sm:$0xff]
        %v448 = vld [vmem:[%s3 + $0x228] sm:$0xff]
        %v449 = vld [vmem:[%s3 + $0x230] sm:$0xff]
        %v450 = vld [vmem:[%s3 + $0x238] sm:$0xff]
        %v451 = vld [vmem:[%s3 + $0x240] sm:$0xff]
        %v452 = vld [vmem:[%s3 + $0x248] sm:$0xff]
        %v453 = vld [vmem:[%s3 + $0x250] sm:$0xff]
        %v454 = vld [vmem:[%s3 + $0x258] sm:$0xff]
        %v455 = vld [vmem:[%s3 + $0x260] sm:$0xff]
        %v456 = vld [vmem:[%s3 + $0x268] sm:$0xff]
        %v457 = vld [vmem:[%s3 + $0x270] sm:$0xff]
        %v458 = vld [vmem:[%s3 + $0x278] sm:$0xff]
        %v459 = vld [vmem:[%s3 + $0x280] sm:$0xff]
        %v460 = vld [vmem:[%s3 + $0x288] sm:$0xff]
        %v461 = vld [vmem:[%s3 + $0x290] sm:$0xff]
        %v462 = vld [vmem:[%s3 + $0x298] sm:$0xff]
        %v463 = vld [vmem:[%s3 + $0x2a0] sm:$0xff]
        %v464 = vld [vmem:[%s3 + $0x2a8] sm:$0xff]
        %v465 = vld [vmem:[%s3 + $0x2b0] sm:$0xff]
        %v466 = vld [vmem:[%s3 + $0x2b8] sm:$0xff]
        %v467 = vld [vmem:[%s3 + $0x2c0] sm:$0xff]
        %v468 = vld [vmem:[%s3 + $0x2c8] sm:$0xff]
        %v469 = vld [vmem:[%s3 + $0x2d0] sm:$0xff]
        %v470 = vld [vmem:[%s3 + $0x2d8] sm:$0xff]
        %v471 = vld [vmem:[%s3 + $0x2e0] sm:$0xff]
        %v472 = vld [vmem:[%s3 + $0x2e8] sm:$0xff]
        %v473 = vld [vmem:[%s3 + $0x2f0] sm:$0xff]
        %v474 = vld [vmem:[%s3 + $0x2f8] sm:$0xff]
        %v475 = vld [vmem:[%s3 + $0x300] sm:$0xff]
        %v476 = vld [vmem:[%s3 + $0x308] sm:$0xff]
        %v477 = vld [vmem:[%s3 + $0x310] sm:$0xff]
        %v478 = vld [vmem:[%s3 + $0x318] sm:$0xff]
        %v479 = vld [vmem:[%s3 + $0x320] sm:$0xff]
        %v480 = vld [vmem:[%s3 + $0x328] sm:$0xff]
        %v481 = vld [vmem:[%s3 + $0x330] sm:$0xff]
        %v482 = vld [vmem:[%s3 + $0x338] sm:$0xff]
        %v483 = vld [vmem:[%s3 + $0x340] sm:$0xff]
        %v484 = vld [vmem:[%s3 + $0x348] sm:$0xff]
        %v485 = vld [vmem:[%s3 + $0x350] sm:$0xff]
        %v486 = vld [vmem:[%s3 + $0x358] sm:$0xff]
        %v487 = vld [vmem:[%s3 + $0x360] sm:$0xff]
        %v488 = vld [vmem:[%s3 + $0x368] sm:$0xff]
        %v489 = vld [vmem:[%s3 + $0x370] sm:$0xff]
        %v490 = vld [vmem:[%s3 + $0x378] sm:$0xff]
        %v491 = vld [vmem:[%s3 + $0x380] sm:$0xff]
        %v492 = vld [vmem:[%s3 + $0x388] sm:$0xff]
        %v493 = vld [vmem:[%s3 + $0x390] sm:$0xff]
        %v494 = vld [vmem:[%s3 + $0x398] sm:$0xff]
        %v495 = vld [vmem:[%s3 + $0x3a0] sm:$0xff]
        %v496 = vld [vmem:[%s3 + $0x3a8] sm:$0xff]
        %v497 = vld [vmem:[%s3 + $0x3b0] sm:$0xff]
        %v498 = vld [vmem:[%s3 + $0x3b8] sm:$0xff]
        %v499 = vld [vmem:[%s3 + $0x3c0] sm:$0xff]
        %v500 = vld [vmem:[%s3 + $0x3c8] sm:$0xff]
        %v501 = vld [vmem:[%s3 + $0x3d0] sm:$0xff]
        %v502 = vld [vmem:[%s3 + $0x3d8] sm:$0xff]
        %v503 = vld [vmem:[%s3 + $0x3e0] sm:$0xff]
        %v504 = vld [vmem:[%s3 + $0x3e8] sm:$0xff]
        %v505 = vld [vmem:[%s3 + $0x3f0] sm:$0xff]
        %v506 = vld [vmem:[%s3 + $0x3f8] sm:$0xff]
        %v507 = vld [vmem:[%s3 + $0x400] sm:$0xff]
        %v508 = vld [vmem:[%s3 + $0x408] sm:$0xff]
        %v509 = vld [vmem:[%s3 + $0x410] sm:$0xff]
        %v510 = vld [vmem:[%s3 + $0x418] sm:$0xff]
        %v511 = vld [vmem:[%s3 + $0x420] sm:$0xff]
        %v512 = vld [vmem:[%s3 + $0x428] sm:$0xff]
        %v513 = vld [vmem:[%s3 + $0x430] sm:$0xff]
        %v514 = vld [vmem:[%s3 + $0x438] sm:$0xff]
        %v515 = vld [vmem:[%s3 + $0x440] sm:$0xff]
        %v516 = vld [vmem:[%s3 + $0x448] sm:$0xff]
        %v517 = vld [vmem:[%s3 + $0x450] sm:$0xff]
        %v518 = vld [vmem:[%s3 + $0x458] sm:$0xff]
        %v519 = vld [vmem:[%s3 + $0x460] sm:$0xff]
        %v520 = vld [vmem:[%s3 + $0x468] sm:$0xff]
        %v521 = vld [vmem:[%s3 + $0x470] sm:$0xff]
        %v522 = vld [vmem:[%s3 + $0x478] sm:$0xff]
        %v523 = vld [vmem:[%s3 + $0x480] sm:$0xff]
        %v524 = vld [vmem:[%s3 + $0x488] sm:$0xff]
        %v525 = vld [vmem:[%s3 + $0x490] sm:$0xff]
        %v526 = vld [vmem:[%s3 + $0x498] sm:$0xff]
        %v527 = vld [vmem:[%s3 + $0x4a0] sm:$0xff]
        %v528 = vld [vmem:[%s3 + $0x4a8] sm:$0xff]
        %v529 = vld [vmem:[%s3 + $0x4b0] sm:$0xff]
        %v530 = vld [vmem:[%s3 + $0x4b8] sm:$0xff]
        %v531 = vld [vmem:[%s3 + $0x4c0] sm:$0xff]
        %v532 = vld [vmem:[%s3 + $0x4c8] sm:$0xff]
        %v533 = vld [vmem:[%s3 + $0x4d0] sm:$0xff]
        %v534 = vld [vmem:[%s3 + $0x4d8] sm:$0xff]
        %v535 = vld [vmem:[%s3 + $0x4e0] sm:$0xff]
        %v536 = vld [vmem:[%s3 + $0x4e8] sm:$0xff]
        %v537 = vld [vmem:[%s3 + $0x4f0] sm:$0xff]
        %v538 = vld [vmem:[%s3 + $0x4f8] sm:$0xff]
        %v539 = vld [vmem:[%s3 + $0x500] sm:$0xff]
        %v540 = vld [vmem:[%s3 + $0x508] sm:$0xff]
        %v541 = vld [vmem:[%s3 + $0x510] sm:$0xff]
        %v542 = vld [vmem:[%s3 + $0x518] sm:$0xff]
        %v543 = vld [vmem:[%s3 + $0x520] sm:$0xff]
        %v544 = vld [vmem:[%s3 + $0x528] sm:$0xff]
        %v545 = vld [vmem:[%s3 + $0x530] sm:$0xff]
        %v546 = vld [vmem:[%s3 + $0x538] sm:$0xff]
        %v547 = vld [vmem:[%s3 + $0x540] sm:$0xff]
        %v548 = vld [vmem:[%s3 + $0x548] sm:$0xff]
        %v549 = vld [vmem:[%s3 + $0x550] sm:$0xff]
        %v550 = vld [vmem:[%s3 + $0x558] sm:$0xff]
        %v551 = vld [vmem:[%s3 + $0x560] sm:$0xff]
        %v552 = vld [vmem:[%s3 + $0x568] sm:$0xff]
        %v553 = vld [vmem:[%s3 + $0x570] sm:$0xff]
        %v554 = vld [vmem:[%s3 + $0x578] sm:$0xff]
        %v555 = vld [vmem:[%s3 + $0x580] sm:$0xff]
        %v556 = vld [vmem:[%s3 + $0x588] sm:$0xff]
        %v557 = vld [vmem:[%s3 + $0x590] sm:$0xff]
        %v558 = vld [vmem:[%s3 + $0x598] sm:$0xff]
        %v559 = vld [vmem:[%s3 + $0x5a0] sm:$0xff]
        %v560 = vld [vmem:[%s3 + $0x5a8] sm:$0xff]
        %v561 = vld [vmem:[%s3 + $0x5b0] sm:$0xff]
        %v562 = vld [vmem:[%s3 + $0x5b8] sm:$0xff]
        %v563 = vld [vmem:[%s3 + $0x5c0] sm:$0xff]
        %v564 = vld [vmem:[%s3 + $0x5c8] sm:$0xff]
        %v565 = vld [vmem:[%s3 + $0x5d0] sm:$0xff]
        %v566 = vld [vmem:[%s3 + $0x5d8] sm:$0xff]
        %v567 = vld [vmem:[%s3 + $0x5e0] sm:$0xff]
        %v568 = vld [vmem:[%s3 + $0x5e8] sm:$0xff]
        %v569 = vld [vmem:[%s3 + $0x5f0] sm:$0xff]
        %v570 = vld [vmem:[%s3 + $0x5f8] sm:$0xff]
        %v571 = vld [vmem:[%s3 + $0x600] sm:$0xff]
        %v572 = vld [vmem:[%s3 + $0x608] sm:$0xff]
        %v573 = vld [vmem:[%s3 + $0x610] sm:$0xff]
        %v574 = vld [vmem:[%s3 + $0x618] sm:$0xff]
        %v575 = vld [vmem:[%s3 + $0x620] sm:$0xff]
        %v576 = vld [vmem:[%s3 + $0x628] sm:$0xff]
        %v577 = vld [vmem:[%s3 + $0x630] sm:$0xff]
        %v578 = vld [vmem:[%s3 + $0x638] sm:$0xff]
        %v579 = vld [vmem:[%s3 + $0x640] sm:$0xff]
        %v580 = vld [vmem:[%s3 + $0x648] sm:$0xff]
        %v581 = vld [vmem:[%s3 + $0x650] sm:$0xff]
        %v582 = vld [vmem:[%s3 + $0x658] sm:$0xff]
        %v583 = vld [vmem:[%s3 + $0x660] sm:$0xff]
        %v584 = vld [vmem:[%s3 + $0x668] sm:$0xff]
        %v585 = vld [vmem:[%s3 + $0x670] sm:$0xff]
        %v586 = vld [vmem:[%s3 + $0x678] sm:$0xff]
        %v587 = vld [vmem:[%s3 + $0x680] sm:$0xff]
        %v588 = vld [vmem:[%s3 + $0x688] sm:$0xff]
        %v589 = vld [vmem:[%s3 + $0x690] sm:$0xff]
        %v590 = vld [vmem:[%s3 + $0x698] sm:$0xff]
        %v591 = vld [vmem:[%s3 + $0x6a0] sm:$0xff]
        %v592 = vld [vmem:[%s3 + $0x6a8] sm:$0xff]
        %v593 = vld [vmem:[%s3 + $0x6b0] sm:$0xff]
        %v594 = vld [vmem:[%s3 + $0x6b8] sm:$0xff]
        %v595 = vld [vmem:[%s3 + $0x6c0] sm:$0xff]
        %v596 = vld [vmem:[%s3 + $0x6c8] sm:$0xff]
        %v597 = vld [vmem:[%s3 + $0x6d0] sm:$0xff]
        %v598 = vld [vmem:[%s3 + $0x6d8] sm:$0xff]
        %v599 = vld [vmem:[%s3 + $0x6e0] sm:$0xff]
        %v600 = vld [vmem:[%s3 + $0x6e8] sm:$0xff]
        %v601 = vld [vmem:[%s3 + $0x6f0] sm:$0xff]
        %v602 = vld [vmem:[%s3 + $0x6f8] sm:$0xff]
        %v603 = vld [vmem:[%s3 + $0x700] sm:$0xff]
        %v604 = vld [vmem:[%s3 + $0x708] sm:$0xff]
        %v605 = vld [vmem:[%s3 + $0x710] sm:$0xff]
        %v606 = vld [vmem:[%s3 + $0x718] sm:$0xff]
        %v607 = vld [vmem:[%s3 + $0x720] sm:$0xff]
        %v608 = vld [vmem:[%s3 + $0x728] sm:$0xff]
        %v609 = vld [vmem:[%s3 + $0x730] sm:$0xff]
        %v610 = vld [vmem:[%s3 + $0x738] sm:$0xff]
        %v611 = vld [vmem:[%s3 + $0x740] sm:$0xff]
        %v612 = vld [vmem:[%s3 + $0x748] sm:$0xff]
        %v613 = vld [vmem:[%s3 + $0x750] sm:$0xff]
        %v614 = vld [vmem:[%s3 + $0x758] sm:$0xff]
        %v615 = vld [vmem:[%s3 + $0x760] sm:$0xff]
        %v616 = vld [vmem:[%s3 + $0x768] sm:$0xff]
        %v617 = vld [vmem:[%s3 + $0x770] sm:$0xff]
        %v618 = vld [vmem:[%s3 + $0x778] sm:$0xff]
        %v619 = vld [vmem:[%s3 + $0x780] sm:$0xff]
        %v620 = vld [vmem:[%s3 + $0x788] sm:$0xff]
        %v621 = vld [vmem:[%s3 + $0x790] sm:$0xff]
        %v622 = vld [vmem:[%s3 + $0x798] sm:$0xff]
        %v623 = vld [vmem:[%s3 + $0x7a0] sm:$0xff]
        %v624 = vld [vmem:[%s3 + $0x7a8] sm:$0xff]
        %v625 = vld [vmem:[%s3 + $0x7b0] sm:$0xff]
        %v626 = vld [vmem:[%s3 + $0x7b8] sm:$0xff]
        %v627 = vld [vmem:[%s3 + $0x7c0] sm:$0xff]
        %v628 = vld [vmem:[%s3 + $0x7c8] sm:$0xff]
        %v629 = vld [vmem:[%s3 + $0x7d0] sm:$0xff]
        %v630 = vld [vmem:[%s3 + $0x7d8] sm:$0xff]
        %v631 = vld [vmem:[%s3 + $0x7e0] sm:$0xff]
        %v632 = vld [vmem:[%s3 + $0x7e8] sm:$0xff]
        %v633 = vld [vmem:[%s3 + $0x7f0] sm:$0xff]
        %v634 = vld [vmem:[%s3 + $0x7f8] sm:$0xff]
        %v635 = vld [vmem:[%s4] sm:$0x1]
        %v638 = vperm.slane %v377, 0
        %v639 = vperm.slane %v377, 1
        %v640 = vperm.slane %v377, 2
        %v641 = vperm.slane %v377, 3
        %v642 = vperm.slane %v377, 4
        %v643 = vperm.slane %v377, 5
        %v644 = vperm.slane %v377, 6
        %v645 = vperm.slane %v377, 7
        %v646 = vperm.slane %v378, 0
        %v647 = vperm.slane %v378, 1
        %v648 = vperm.slane %v378, 2
        %v649 = vperm.slane %v378, 3
        %v650 = vperm.slane %v378, 4
        %v651 = vperm.slane %v378, 5
        %v652 = vperm.slane %v378, 6
        %v653 = vperm.slane %v378, 7
        %670 = vmatpush.msra.mxu0 %v394
        %671 = vmatpush.msra.mxu0 %v393
        %672 = vmatpush.msra.mxu0 %v392
        %673 = vmatpush.msra.mxu0 %v391
        %674 = vmatpush.msra.mxu0 %v390
        %675 = vmatpush.msra.mxu0 %v389
        %676 = vmatpush.msra.mxu0 %v388
        %677 = vmatpush.msra.mxu0 %v387
        %678 = vmatpush.msra.mxu0 %v386
        %679 = vmatpush.msra.mxu0 %v385
        %680 = vmatpush.msra.mxu0 %v384
        %681 = vmatpush.msra.mxu0 %v383
        %682 = vmatpush.msra.mxu0 %v382
        %683 = vmatpush.msra.mxu0 %v381
        %684 = vmatpush.msra.mxu0 %v380
        %685 = vmatpush.msra.mxu0 %v379
        %686 = vmatmul.f32.gmra.mxu0 %v638
        %v687 = vpop.f32.mrf.mxu0
        %v688 = vadd.f32 %v635, %v687
        %689 = vdwg.mxu0
        %690 = vmatpush.msra.mxu0 %v410
        %691 = vmatpush.msra.mxu0 %v409
        %692 = vmatpush.msra.mxu0 %v408
        %693 = vmatpush.msra.mxu0 %v407
        %694 = vmatpush.msra.mxu0 %v406
        %695 = vmatpush.msra.mxu0 %v405
        %696 = vmatpush.msra.mxu0 %v404
        %697 = vmatpush.msra.mxu0 %v403
        %698 = vmatpush.msra.mxu0 %v402
        %699 = vmatpush.msra.mxu0 %v401
        %700 = vmatpush.msra.mxu0 %v400
        %701 = vmatpush.msra.mxu0 %v399
        %702 = vmatpush.msra.mxu0 %v398
        %703 = vmatpush.msra.mxu0 %v397
        %704 = vmatpush.msra.mxu0 %v396
        %705 = vmatpush.msra.mxu0 %v395
        %706 = vmatmul.f32.gmra.mxu0 %v639
        %v707 = vpop.f32.mrf.mxu0
        %v708 = vadd.f32 %v688, %v707
        %709 = vdwg.mxu0
        %710 = vmatpush.msra.mxu0 %v426
        %711 = vmatpush.msra.mxu0 %v425
        %712 = vmatpush.msra.mxu0 %v424
        %713 = vmatpush.msra.mxu0 %v423
        %714 = vmatpush.msra.mxu0 %v422
        %715 = vmatpush.msra.mxu0 %v421
        %716 = vmatpush.msra.mxu0 %v420
        %717 = vmatpush.msra.mxu0 %v419
        %718 = vmatpush.msra.mxu0 %v418
        %719 = vmatpush.msra.mxu0 %v417
        %720 = vmatpush.msra.mxu0 %v416
        %721 = vmatpush.msra.mxu0 %v415
        %722 = vmatpush.msra.mxu0 %v414
        %723 = vmatpush.msra.mxu0 %v413
        %724 = vmatpush.msra.mxu0 %v412
        %725 = vmatpush.msra.mxu0 %v411
        %726 = vmatmul.f32.gmra.mxu0 %v640
        %v727 = vpop.f32.mrf.mxu0
        %v728 = vadd.f32 %v708, %v727
        %729 = vdwg.mxu0
        %730 = vmatpush.msra.mxu0 %v442
        %731 = vmatpush.msra.mxu0 %v441
        %732 = vmatpush.msra.mxu0 %v440
        %733 = vmatpush.msra.mxu0 %v439
        %734 = vmatpush.msra.mxu0 %v438
        %735 = vmatpush.msra.mxu0 %v437
        %736 = vmatpush.msra.mxu0 %v436
        %737 = vmatpush.msra.mxu0 %v435
        %738 = vmatpush.msra.mxu0 %v434
        %739 = vmatpush.msra.mxu0 %v433
        %740 = vmatpush.msra.mxu0 %v432
        %741 = vmatpush.msra.mxu0 %v431
        %742 = vmatpush.msra.mxu0 %v430
        %743 = vmatpush.msra.mxu0 %v429
        %744 = vmatpush.msra.mxu0 %v428
        %745 = vmatpush.msra.mxu0 %v427
        %746 = vmatmul.f32.gmra.mxu0 %v641
        %v747 = vpop.f32.mrf.mxu0
        %v748 = vadd.f32 %v728, %v747
        %749 = vdwg.mxu0
        %750 = vmatpush.msra.mxu0 %v458
        %751 = vmatpush.msra.mxu0 %v457
        %752 = vmatpush.msra.mxu0 %v456
        %753 = vmatpush.msra.mxu0 %v455
        %754 = vmatpush.msra.mxu0 %v454
        %755 = vmatpush.msra.mxu0 %v453
        %756 = vmatpush.msra.mxu0 %v452
        %757 = vmatpush.msra.mxu0 %v451
        %758 = vmatpush.msra.mxu0 %v450
        %759 = vmatpush.msra.mxu0 %v449
        %760 = vmatpush.msra.mxu0 %v448
        %761 = vmatpush.msra.mxu0 %v447
        %762 = vmatpush.msra.mxu0 %v446
        %763 = vmatpush.msra.mxu0 %v445
        %764 = vmatpush.msra.mxu0 %v444
        %765 = vmatpush.msra.mxu0 %v443
        %766 = vmatmul.f32.gmra.mxu0 %v642
        %v767 = vpop.f32.mrf.mxu0
        %v768 = vadd.f32 %v748, %v767
        %769 = vdwg.mxu0
        %770 = vmatpush.msra.mxu0 %v474
        %771 = vmatpush.msra.mxu0 %v473
        %772 = vmatpush.msra.mxu0 %v472
        %773 = vmatpush.msra.mxu0 %v471
        %774 = vmatpush.msra.mxu0 %v470
        %775 = vmatpush.msra.mxu0 %v469
        %776 = vmatpush.msra.mxu0 %v468
        %777 = vmatpush.msra.mxu0 %v467
        %778 = vmatpush.msra.mxu0 %v466
        %779 = vmatpush.msra.mxu0 %v465
        %780 = vmatpush.msra.mxu0 %v464
        %781 = vmatpush.msra.mxu0 %v463
        %782 = vmatpush.msra.mxu0 %v462
        %783 = vmatpush.msra.mxu0 %v461
        %784 = vmatpush.msra.mxu0 %v460
        %785 = vmatpush.msra.mxu0 %v459
        %786 = vmatmul.f32.gmra.mxu0 %v643
        %v787 = vpop.f32.mrf.mxu0
        %v788 = vadd.f32 %v768, %v787
        %789 = vdwg.mxu0
        %790 = vmatpush.msra.mxu0 %v490
        %791 = vmatpush.msra.mxu0 %v489
        %792 = vmatpush.msra.mxu0 %v488
        %793 = vmatpush.msra.mxu0 %v487
        %794 = vmatpush.msra.mxu0 %v486
        %795 = vmatpush.msra.mxu0 %v485
        %796 = vmatpush.msra.mxu0 %v484
        %797 = vmatpush.msra.mxu0 %v483
        %798 = vmatpush.msra.mxu0 %v482
        %799 = vmatpush.msra.mxu0 %v481
        %800 = vmatpush.msra.mxu0 %v480
        %801 = vmatpush.msra.mxu0 %v479
        %802 = vmatpush.msra.mxu0 %v478
        %803 = vmatpush.msra.mxu0 %v477
        %804 = vmatpush.msra.mxu0 %v476
        %805 = vmatpush.msra.mxu0 %v475
        %806 = vmatmul.f32.gmra.mxu0 %v644
        %v807 = vpop.f32.mrf.mxu0
        %v808 = vadd.f32 %v788, %v807
        %809 = vdwg.mxu0
        %810 = vmatpush.msra.mxu0 %v506
        %811 = vmatpush.msra.mxu0 %v505
        %812 = vmatpush.msra.mxu0 %v504
        %813 = vmatpush.msra.mxu0 %v503
        %814 = vmatpush.msra.mxu0 %v502
        %815 = vmatpush.msra.mxu0 %v501
        %816 = vmatpush.msra.mxu0 %v500
        %817 = vmatpush.msra.mxu0 %v499
        %818 = vmatpush.msra.mxu0 %v498
        %819 = vmatpush.msra.mxu0 %v497
        %820 = vmatpush.msra.mxu0 %v496
        %821 = vmatpush.msra.mxu0 %v495
        %822 = vmatpush.msra.mxu0 %v494
        %823 = vmatpush.msra.mxu0 %v493
        %824 = vmatpush.msra.mxu0 %v492
        %825 = vmatpush.msra.mxu0 %v491
        %826 = vmatmul.f32.gmra.mxu0 %v645
        %v827 = vpop.f32.mrf.mxu0
        %v828 = vadd.f32 %v808, %v827
        %829 = vdwg.mxu0
        %830 = vmatpush.msra.mxu0 %v522
        %831 = vmatpush.msra.mxu0 %v521
        %832 = vmatpush.msra.mxu0 %v520
        %833 = vmatpush.msra.mxu0 %v519
        %834 = vmatpush.msra.mxu0 %v518
        %835 = vmatpush.msra.mxu0 %v517
        %836 = vmatpush.msra.mxu0 %v516
        %837 = vmatpush.msra.mxu0 %v515
        %838 = vmatpush.msra.mxu0 %v514
        %839 = vmatpush.msra.mxu0 %v513
        %840 = vmatpush.msra.mxu0 %v512
        %841 = vmatpush.msra.mxu0 %v511
        %842 = vmatpush.msra.mxu0 %v510
        %843 = vmatpush.msra.mxu0 %v509
        %844 = vmatpush.msra.mxu0 %v508
        %845 = vmatpush.msra.mxu0 %v507
        %846 = vmatmul.f32.gmra.mxu0 %v646
        %v847 = vpop.f32.mrf.mxu0
        %v848 = vadd.f32 %v828, %v847
        %849 = vdwg.mxu0
        %850 = vmatpush.msra.mxu0 %v538
        %851 = vmatpush.msra.mxu0 %v537
        %852 = vmatpush.msra.mxu0 %v536
        %853 = vmatpush.msra.mxu0 %v535
        %854 = vmatpush.msra.mxu0 %v534
        %855 = vmatpush.msra.mxu0 %v533
        %856 = vmatpush.msra.mxu0 %v532
        %857 = vmatpush.msra.mxu0 %v531
        %858 = vmatpush.msra.mxu0 %v530
        %859 = vmatpush.msra.mxu0 %v529
        %860 = vmatpush.msra.mxu0 %v528
        %861 = vmatpush.msra.mxu0 %v527
        %862 = vmatpush.msra.mxu0 %v526
        %863 = vmatpush.msra.mxu0 %v525
        %864 = vmatpush.msra.mxu0 %v524
        %865 = vmatpush.msra.mxu0 %v523
        %866 = vmatmul.f32.gmra.mxu0 %v647
        %v867 = vpop.f32.mrf.mxu0
        %v868 = vadd.f32 %v848, %v867
        %869 = vdwg.mxu0
        %870 = vmatpush.msra.mxu0 %v554
        %871 = vmatpush.msra.mxu0 %v553
        %872 = vmatpush.msra.mxu0 %v552
        %873 = vmatpush.msra.mxu0 %v551
        %874 = vmatpush.msra.mxu0 %v550
        %875 = vmatpush.msra.mxu0 %v549
        %876 = vmatpush.msra.mxu0 %v548
        %877 = vmatpush.msra.mxu0 %v547
        %878 = vmatpush.msra.mxu0 %v546
        %879 = vmatpush.msra.mxu0 %v545
        %880 = vmatpush.msra.mxu0 %v544
        %881 = vmatpush.msra.mxu0 %v543
        %882 = vmatpush.msra.mxu0 %v542
        %883 = vmatpush.msra.mxu0 %v541
        %884 = vmatpush.msra.mxu0 %v540
        %885 = vmatpush.msra.mxu0 %v539
        %886 = vmatmul.f32.gmra.mxu0 %v648
        %v887 = vpop.f32.mrf.mxu0
        %v888 = vadd.f32 %v868, %v887
        %889 = vdwg.mxu0
        %890 = vmatpush.msra.mxu0 %v570
        %891 = vmatpush.msra.mxu0 %v569
        %892 = vmatpush.msra.mxu0 %v568
        %893 = vmatpush.msra.mxu0 %v567
        %894 = vmatpush.msra.mxu0 %v566
        %895 = vmatpush.msra.mxu0 %v565
        %896 = vmatpush.msra.mxu0 %v564
        %897 = vmatpush.msra.mxu0 %v563
        %898 = vmatpush.msra.mxu0 %v562
        %899 = vmatpush.msra.mxu0 %v561
        %900 = vmatpush.msra.mxu0 %v560
        %901 = vmatpush.msra.mxu0 %v559
        %902 = vmatpush.msra.mxu0 %v558
        %903 = vmatpush.msra.mxu0 %v557
        %904 = vmatpush.msra.mxu0 %v556
        %905 = vmatpush.msra.mxu0 %v555
        %906 = vmatmul.f32.gmra.mxu0 %v649
        %v907 = vpop.f32.mrf.mxu0
        %v908 = vadd.f32 %v888, %v907
        %909 = vdwg.mxu0
        %910 = vmatpush.msra.mxu0 %v586
        %911 = vmatpush.msra.mxu0 %v585
        %912 = vmatpush.msra.mxu0 %v584
        %913 = vmatpush.msra.mxu0 %v583
        %914 = vmatpush.msra.mxu0 %v582
        %915 = vmatpush.msra.mxu0 %v581
        %916 = vmatpush.msra.mxu0 %v580
        %917 = vmatpush.msra.mxu0 %v579
        %918 = vmatpush.msra.mxu0 %v578
        %919 = vmatpush.msra.mxu0 %v577
        %920 = vmatpush.msra.mxu0 %v576
        %921 = vmatpush.msra.mxu0 %v575
        %922 = vmatpush.msra.mxu0 %v574
        %923 = vmatpush.msra.mxu0 %v573
        %924 = vmatpush.msra.mxu0 %v572
        %925 = vmatpush.msra.mxu0 %v571
        %926 = vmatmul.f32.gmra.mxu0 %v650
        %v927 = vpop.f32.mrf.mxu0
        %v928 = vadd.f32 %v908, %v927
        %929 = vdwg.mxu0
        %930 = vmatpush.msra.mxu0 %v602
        %931 = vmatpush.msra.mxu0 %v601
        %932 = vmatpush.msra.mxu0 %v600
        %933 = vmatpush.msra.mxu0 %v599
        %934 = vmatpush.msra.mxu0 %v598
        %935 = vmatpush.msra.mxu0 %v597
        %936 = vmatpush.msra.mxu0 %v596
        %937 = vmatpush.msra.mxu0 %v595
        %938 = vmatpush.msra.mxu0 %v594
        %939 = vmatpush.msra.mxu0 %v593
        %940 = vmatpush.msra.mxu0 %v592
        %941 = vmatpush.msra.mxu0 %v591
        %942 = vmatpush.msra.mxu0 %v590
        %943 = vmatpush.msra.mxu0 %v589
        %944 = vmatpush.msra.mxu0 %v588
        %945 = vmatpush.msra.mxu0 %v587
        %946 = vmatmul.f32.gmra.mxu0 %v651
        %v947 = vpop.f32.mrf.mxu0
        %v948 = vadd.f32 %v928, %v947
        %949 = vdwg.mxu0
        %950 = vmatpush.msra.mxu0 %v618
        %951 = vmatpush.msra.mxu0 %v617
        %952 = vmatpush.msra.mxu0 %v616
        %953 = vmatpush.msra.mxu0 %v615
        %954 = vmatpush.msra.mxu0 %v614
        %955 = vmatpush.msra.mxu0 %v613
        %956 = vmatpush.msra.mxu0 %v612
        %957 = vmatpush.msra.mxu0 %v611
        %958 = vmatpush.msra.mxu0 %v610
        %959 = vmatpush.msra.mxu0 %v609
        %960 = vmatpush.msra.mxu0 %v608
        %961 = vmatpush.msra.mxu0 %v607
        %962 = vmatpush.msra.mxu0 %v606
        %963 = vmatpush.msra.mxu0 %v605
        %964 = vmatpush.msra.mxu0 %v604
        %965 = vmatpush.msra.mxu0 %v603
        %966 = vmatmul.f32.gmra.mxu0 %v652
        %v967 = vpop.f32.mrf.mxu0
        %v968 = vadd.f32 %v948, %v967
        %969 = vdwg.mxu0
        %970 = vmatpush.msra.mxu0 %v634
        %971 = vmatpush.msra.mxu0 %v633
        %972 = vmatpush.msra.mxu0 %v632
        %973 = vmatpush.msra.mxu0 %v631
        %974 = vmatpush.msra.mxu0 %v630
        %975 = vmatpush.msra.mxu0 %v629
        %976 = vmatpush.msra.mxu0 %v628
        %977 = vmatpush.msra.mxu0 %v627
        %978 = vmatpush.msra.mxu0 %v626
        %979 = vmatpush.msra.mxu0 %v625
        %980 = vmatpush.msra.mxu0 %v624
        %981 = vmatpush.msra.mxu0 %v623
        %982 = vmatpush.msra.mxu0 %v622
        %983 = vmatpush.msra.mxu0 %v621
        %984 = vmatpush.msra.mxu0 %v620
        %985 = vmatpush.msra.mxu0 %v619
        %986 = vmatmul.f32.gmra.mxu0 %v653
        %v987 = vpop.f32.mrf.mxu0
        %v988 = vadd.f32 %v968, %v987
        %989 = vdwg.mxu0
        %v990 = vsel %vm327, %v988, -inf
        %991 = vmax.xlane.f32.xlu0 %v990
        %v992 = vpop.xlane.xlu0 %991
        %v993 = vsub.f32 %v988, %v992
        %v994 = vmul.f32 %v993, 1.442695
        %v995 = vpow.pop %v994
        %v996 = vsel %vm327, %v995, 0.0
        %997 = vadd.xlane.f32.xlu0 %v996
        %v998 = vpop.xlane.xlu0 %997
        %v999 = vrcp.pop %v998
        %v1000 = vmul.f32 %v998, %v999
        %v1001 = vsub.f32 1.0, %v1000
        %v1002 = vmul.f32 %v999, %v1001
        %v1003 = vadd.f32 %v999, %v1002
        %vm1004 = vweird.f32 %v998
        %vm1005 = vweird.f32 %v999
        %vm1006 = vmor %vm1004, %vm1005
        %v1007 = vsel %vm1006, %v999, %v1003
        %v1008 = vand.u32 2147483647, %v998
        %vm1009 = vcmp.eq.f32.partialorder %v1008, 8.507059e+37
        %v1010 = vand.u32 %v998, 2147483648
        %v1011 = vor.u32 1.1754944e-38, %v1010
        %v1012 = vsel %vm1009, %v1011, %v1007
        %v1013 = vmul.f32 %v995, %v1012
        %1014 = vst [vmem:[%s259] sm:$0x1] %v1013
        %s1015 = sand.u32 %s137, 1
        %s1016 = scalar_lea.sflag [#allocation5], %s1015
        %s1017 = sand.u32 %s137, 1
        %s1018 = scalar_lea.vmem [#allocation4], %s1017
        // Predicated region
        $region64: #{forward.1} parent=58 // pred_check
          %p1019 = pneg %p147
        $region65: #{forward.1} parent=58 // pred_check_branch
          %1021 = sbr.rel (%p1019) target = $region67
        $region66: #{forward.1} parent=58 // pred_region
          %1023 = vsyncadd %s1016, 0
          %s1024 = scalar_lea.hbm %s5, %s19
          %s1026 = sshll.u32 %s1018, 4
          %s1027 = int_to_ptr.vmem [resolvable:$true] %s1026
          %s1028 = sshll.u32 %s1024, 4
          %s1029 = int_to_ptr.hbm [resolvable:$true] %s1028
          %1031 = dma.vmem_to_hbm [thread:$0]  %s1027, 16, %s1029, %s1016
        $region67: #{forward.1} parent=58 // pred_fallthru
          _
      $region59: #{forward.1} parent=5 // pred_fallthru
        _
      %p1032 = scmp.le.s32.totalorder 2, %s14
      // Predicated region
      $region68: #{forward.1} parent=5 // pred_check
        %p1033 = pneg %p1032
      $region69: #{forward.1} parent=5 // pred_check_branch
        %1035 = sbr.rel (%p1033) target = $region71
      $region70: #{forward.1} parent=5 // pred_region
        %s1036 = ssub.s32 %s14, 2
        // Predicated region
        $region72: #{forward.1} parent=70 // pred_check
          %p1037 = pneg %p153
        $region73: #{forward.1} parent=70 // pred_check_branch
          %1039 = sbr.rel (%p1037) target = $region75
        $region74: #{forward.1} parent=70 // pred_region
          %s1040 = sand.u32 %s138, 1
          %s1041 = scalar_lea.sflag [#allocation5], %s1040
          %s1042 = sand.u32 %s138, 1
          %s1043 = scalar_lea.vmem [#allocation4], %s1042
          %1045 = dma.done %s1041, 16
        $region75: #{forward.1} parent=70 // pred_fallthru
          _
      $region71: #{forward.1} parent=5 // pred_fallthru
        _
    $region6: #{forward.1} parent=1 // loop_footer
      %s18 = sadd.s32 1, %s14
    $region7: #{forward.1} parent=1 // loop_footer_branch
      %13 = sbr.rel target = $region3
    $region8: #{forward.1} parent=1 // loop_exit
      _
    %1046 = vsyncpa [#allocation5], 1
    %s1047 = scalar_lea.sflag [#allocation5], 1
    %1048 = vsyncpa %s1047, 1

</llo_original>
